<compile_context>
chip_gen: v5e
topology: v5e:2x2
jax: 0.10.0
libtpu: 0.0.40
codegen_flags: <defaults>
</compile_context>

<pallas_src>
import jax
import jax.numpy as jnp
from jax import lax
from jax.experimental import pallas as pl
from jax.experimental.pallas import tpu as pltpu


def _round_up(n, m):
    return pl.cdiv(n, m) * m


def mlp_kernel(x_ref, w1_ref, b1_ref, w2_ref, b2_ref, o_ref, acc_ref):
    """One (batch-tile, H-tile) step of y = tanh(x @ W1.T + b1) @ W2.T + b2."""
    k = pl.program_id(1)

    @pl.when(k == 0)
    def _init():
        acc_ref[...] = jnp.zeros_like(acc_ref)

    # layer1 K-tile: h_k = tanh(x @ W1_k.T + b1_k).
    # Contract on W1's last axis (torch layout) -> no pre-transpose needed.
    h = lax.dot_general(
        x_ref[...], w1_ref[...],
        dimension_numbers=(((1,), (1,)), ((), ())),
        preferred_element_type=jnp.float32)
    h = jnp.tanh(h + b1_ref[...])  # bias + tanh in f32 (EUP slot)

    # layer2 partial sum: acc += h_k @ W2_k.T (contract on W2's last axis).
    acc_ref[...] += lax.dot_general(
        h.astype(w2_ref.dtype), w2_ref[...],
        dimension_numbers=(((1,), (1,)), ((), ())),
        preferred_element_type=jnp.float32)

    @pl.when(k == pl.num_programs(1) - 1)
    def _finalize():
        # b2 added exactly once per output tile (not per K step).
        o_ref[...] = (acc_ref[...] + b2_ref[...]).astype(o_ref.dtype)


def mlp_forward(x, w1, b1, w2, b2, *, tm_max=256, tk_max=512,
                compute_dtype=None):
    """MLP forward with torch nn.Linear parameter layout.

    x: (B, D_in); w1: (H, D_in); b1: (H,); w2: (D_out, H); b2: (D_out,).
    compute_dtype: optional dtype (e.g. jnp.bfloat16) for x / W1 / W2 on the
    MXU; accumulation and the tanh/bias epilogues remain float32.
    """
    B, d_in = x.shape
    H = w1.shape[0]
    d_out = w2.shape[0]
    out_dtype = x.dtype
    cdt = x.dtype if compute_dtype is None else compute_dtype

    # ---- lane-dense padding (glue, not hot path): features -> multiple of
    #      128 lanes, batch -> multiple of 8 sublanes. Zero padding is exact
    #      for this MLP (padded hidden cols give tanh(0)=0 and padded W2
    #      columns are zero), padded batch / output columns are sliced away.
    d_in_p = _round_up(d_in, 128)
    d_out_p = _round_up(d_out, 128)
    tm = min(tm_max, _round_up(B, 8))
    b_pad = _round_up(B, tm)
    h_p = _round_up(H, 128)
    tk = min(tk_max, h_p)
    h_p = _round_up(h_p, tk)

    x_p = jnp.zeros((b_pad, d_in_p), cdt).at[:B, :d_in].set(x.astype(cdt))
    w1_p = jnp.zeros((h_p, d_in_p), cdt).at[:H, :d_in].set(w1.astype(cdt))
    w2_p = jnp.zeros((d_out_p, h_p), cdt).at[:d_out, :H].set(w2.astype(cdt))
    b1_p = jnp.zeros((1, h_p), jnp.float32).at[0, :H].set(
        b1.astype(jnp.float32))
    b2_p = jnp.zeros((1, d_out_p), jnp.float32).at[0, :d_out].set(
        b2.astype(jnp.float32))

    grid = (b_pad // tm, h_p // tk)  # batch parallel, H reduction axis last

    out_p = pl.pallas_call(
        mlp_kernel,
        out_shape=jax.ShapeDtypeStruct((b_pad, d_out_p), out_dtype),
        grid_spec=pltpu.PrefetchScalarGridSpec(
            num_scalar_prefetch=0,
            grid=grid,
            in_specs=[
                pl.BlockSpec((tm, d_in_p), lambda i, k: (i, 0)),    # x tile
                pl.BlockSpec((tk, d_in_p), lambda i, k: (k, 0)),    # W1 H-tile
                pl.BlockSpec((1, tk), lambda i, k: (0, k)),         # b1 H-tile
                pl.BlockSpec((d_out_p, tk), lambda i, k: (0, k)),   # W2 H-tile
                pl.BlockSpec((1, d_out_p), lambda i, k: (0, 0)),    # b2
            ],
            out_specs=pl.BlockSpec((tm, d_out_p), lambda i, k: (i, 0)),
            scratch_shapes=[pltpu.VMEM((tm, d_out_p), jnp.float32)],
        ),
        compiler_params=pltpu.CompilerParams(
            dimension_semantics=("parallel", "arbitrary"),
            vmem_limit_bytes=48 * 1024 * 1024,
        ),
    )(x_p, w1_p, b1_p, w2_p, b2_p)

    return out_p[:B, :d_out]


def init_linear_params(key, out_features, in_features, dtype=jnp.float32):
    """Deterministic init mimicking torch.nn.Linear (uniform +-1/sqrt(fan_in))."""
    k_w, k_b = jax.random.split(key)
    bound = 1.0 / jnp.sqrt(jnp.array(in_features, dtype=jnp.float32))
    w = jax.random.uniform(k_w, (out_features, in_features), dtype,
                           minval=-bound, maxval=bound)
    b = jax.random.uniform(k_b, (out_features,), dtype,
                           minval=-bound, maxval=bound)
    return w, b


def _reference(x, w1, b1, w2, b2):
    return jnp.tanh(x @ w1.T + b1) @ w2.T + b2


if __name__ == "__main__":
    key = jax.random.PRNGKey(0)

    # --- test 1: small shapes implied by MLP(input_dim, n_hidden_1, output_dim)
    k_x, k_l1, k_l2, key = jax.random.split(key, 4)
    batch, input_dim, n_hidden_1, output_dim = 8, 16, 32, 8
    x = jax.random.normal(k_x, (batch, input_dim), jnp.float32)
    w1, b1 = init_linear_params(k_l1, n_hidden_1, input_dim)
    w2, b2 = init_linear_params(k_l2, output_dim, n_hidden_1)

    out = jax.block_until_ready(mlp_forward(x, w1, b1, w2, b2))
    ref = _reference(x, w1, b1, w2, b2)
    assert out.shape == (batch, output_dim)
    assert jnp.allclose(out, ref, atol=1e-4, rtol=1e-4), "f32 mismatch"

    # --- test 2: non-aligned medium shapes, multi-tile grid, bf16 MXU path
    k_x, k_l1, k_l2, key = jax.random.split(key, 4)
    batch, input_dim, n_hidden_1, output_dim = 320, 200, 300, 72
    x = jax.random.normal(k_x, (batch, input_dim), jnp.float32)
    w1, b1 = init_linear_params(k_l1, n_hidden_1, input_dim)
    w2, b2 = init_linear_params(k_l2, output_dim, n_hidden_1)

    out = jax.block_until_ready(
        mlp_forward(x, w1, b1, w2, b2, tm_max=128, tk_max=128,
                    compute_dtype=jnp.bfloat16))
    ref = _reference(x, w1, b1, w2, b2)
    assert out.shape == (batch, output_dim)
    assert jnp.allclose(out, ref, atol=3e-2, rtol=3e-2), "bf16 mismatch"

    print("KERNEL_OK")
</pallas_src>

<mosaic_0001>
module attributes {stable_mosaic.version = 11 : i64} {
  func.func @mlp_kernel(%arg0: i32, %arg1: i32, %arg2: memref<8x128xf32, #tpu.memory_space<vmem>>, %arg3: memref<128x128xf32, #tpu.memory_space<vmem>>, %arg4: memref<1x128xf32, #tpu.memory_space<vmem>>, %arg5: memref<128x128xf32, #tpu.memory_space<vmem>>, %arg6: memref<1x128xf32, #tpu.memory_space<vmem>>, %arg7: memref<8x128xf32, #tpu.memory_space<vmem>>, %arg8: memref<8x128xf32, #tpu.memory_space<vmem>>) attributes {dimension_semantics = [#tpu.dimension_semantics<parallel>, #tpu.dimension_semantics<arbitrary>], iteration_bounds = array<i64: 1, 1>, scalar_prefetch = 0 : i64, scratch_operands = 1 : i64, tpu.core_type = #tpu.core_type<tc>, window_params = [{transform_indices = @transform_0, window_bounds = array<i64: 8, 128>}, {transform_indices = @transform_1, window_bounds = array<i64: 128, 128>}, {transform_indices = @transform_2, window_bounds = array<i64: 1, 128>}, {transform_indices = @transform_3, window_bounds = array<i64: 128, 128>}, {pipeline_mode = #tpu.pipeline_mode<synchronous>, transform_indices = @transform_4, window_bounds = array<i64: 1, 128>}, {transform_indices = @transform_5, window_bounds = array<i64: 8, 128>}]} {
    %c0_i32 = arith.constant 0 : i32
    %0 = arith.cmpi eq, %arg1, %c0_i32 : i32
    %1 = arith.extui %0 : i1 to i32
    %c0_i32_0 = arith.constant 0 : i32
    %2 = arith.cmpi ne, %1, %c0_i32_0 : i32
    scf.if %2 {
      %cst_15 = arith.constant 0.000000e+00 : f32
      %18 = vector.broadcast %cst_15 : f32 to vector<8x128xf32>
      %c0_16 = arith.constant 0 : index
      %c0_17 = arith.constant 0 : index
      %19 = vector.load %arg8[%c0_16, %c0_17] : memref<8x128xf32, #tpu.memory_space<vmem>>, vector<8x128xf32>
      tpu.vector_store %arg8[%c0_16, %c0_17], %18 {strides = array<i32>} : memref<8x128xf32, #tpu.memory_space<vmem>>, vector<8x128xf32>,
    } else {
    }
    %c0 = arith.constant 0 : index
    %c0_1 = arith.constant 0 : index
    %3 = vector.load %arg2[%c0, %c0_1] : memref<8x128xf32, #tpu.memory_space<vmem>>, vector<8x128xf32>
    %c0_2 = arith.constant 0 : index
    %c0_3 = arith.constant 0 : index
    %4 = vector.load %arg3[%c0_2, %c0_3] : memref<128x128xf32, #tpu.memory_space<vmem>>, vector<128x128xf32>
    %cst = arith.constant dense<0.000000e+00> : vector<8x128xf32>
    %5 = tpu.matmul %3, %4, %cst {dimension_numbers = #tpu.dot_dimension_numbers<[1], [1], [0], [0], [0, 0, 1, 0], [], []>} : vector<8x128xf32>, vector<128x128xf32>, vector<8x128xf32> -> vector<8x128xf32>
    %c0_4 = arith.constant 0 : index
    %c0_5 = arith.constant 0 : index
    %6 = vector.load %arg4[%c0_4, %c0_5] : memref<1x128xf32, #tpu.memory_space<vmem>>, vector<1x128xf32>
    %7 = vector.broadcast %6 : vector<1x128xf32> to vector<8x128xf32>
    %8 = arith.addf %5, %7 : vector<8x128xf32>
    %9 = math.tanh %8 : vector<8x128xf32>
    %c0_6 = arith.constant 0 : index
    %c0_7 = arith.constant 0 : index
    %10 = vector.load %arg8[%c0_6, %c0_7] : memref<8x128xf32, #tpu.memory_space<vmem>>, vector<8x128xf32>
    %c0_8 = arith.constant 0 : index
    %c0_9 = arith.constant 0 : index
    %11 = vector.load %arg5[%c0_8, %c0_9] : memref<128x128xf32, #tpu.memory_space<vmem>>, vector<128x128xf32>
    %cst_10 = arith.constant dense<0.000000e+00> : vector<8x128xf32>
    %12 = tpu.matmul %9, %11, %cst_10 {dimension_numbers = #tpu.dot_dimension_numbers<[1], [1], [0], [0], [0, 0, 1, 0], [], []>} : vector<8x128xf32>, vector<128x128xf32>, vector<8x128xf32> -> vector<8x128xf32>
    %13 = arith.addf %10, %12 : vector<8x128xf32>
    %c0_11 = arith.constant 0 : index
    %c0_12 = arith.constant 0 : index
    %14 = vector.load %arg8[%c0_11, %c0_12] : memref<8x128xf32, #tpu.memory_space<vmem>>, vector<8x128xf32>
    tpu.vector_store %arg8[%c0_11, %c0_12], %13 {strides = array<i32>} : memref<8x128xf32, #tpu.memory_space<vmem>>, vector<8x128xf32>,
    %c0_i32_13 = arith.constant 0 : i32
    %15 = arith.cmpi eq, %arg1, %c0_i32_13 : i32
    %16 = arith.extui %15 : i1 to i32
    %c0_i32_14 = arith.constant 0 : i32
    %17 = arith.cmpi ne, %16, %c0_i32_14 : i32
    scf.if %17 {
      %c0_15 = arith.constant 0 : index
      %c0_16 = arith.constant 0 : index
      %18 = vector.load %arg8[%c0_15, %c0_16] : memref<8x128xf32, #tpu.memory_space<vmem>>, vector<8x128xf32>
      %c0_17 = arith.constant 0 : index
      %c0_18 = arith.constant 0 : index
      %19 = vector.load %arg6[%c0_17, %c0_18] : memref<1x128xf32, #tpu.memory_space<vmem>>, vector<1x128xf32>
      %20 = vector.broadcast %19 : vector<1x128xf32> to vector<8x128xf32>
      %21 = arith.addf %18, %20 : vector<8x128xf32>
      %c0_19 = arith.constant 0 : index
      %c0_20 = arith.constant 0 : index
      %22 = vector.load %arg7[%c0_19, %c0_20] : memref<8x128xf32, #tpu.memory_space<vmem>>, vector<8x128xf32>
      tpu.vector_store %arg7[%c0_19, %c0_20], %21 {strides = array<i32>} : memref<8x128xf32, #tpu.memory_space<vmem>>, vector<8x128xf32>,
    } else {
    }
    return
  }
  func.func @transform_0(%arg0: i32, %arg1: i32) -> (i32, i32) {
    %c0_i32 = arith.constant 0 : i32
    %c0_i32_0 = arith.constant 0 : i32
    return %arg0, %c0_i32 : i32, i32
  }
  func.func @transform_1(%arg0: i32, %arg1: i32) -> (i32, i32) {
    %c0_i32 = arith.constant 0 : i32
    %c0_i32_0 = arith.constant 0 : i32
    return %arg1, %c0_i32 : i32, i32
  }
  func.func @transform_2(%arg0: i32, %arg1: i32) -> (i32, i32) {
    %c0_i32 = arith.constant 0 : i32
    %c0_i32_0 = arith.constant 0 : i32
    return %c0_i32, %arg1 : i32, i32
  }
  func.func @transform_3(%arg0: i32, %arg1: i32) -> (i32, i32) {
    %c0_i32 = arith.constant 0 : i32
    %c0_i32_0 = arith.constant 0 : i32
    return %c0_i32, %arg1 : i32, i32
  }
  func.func @transform_4(%arg0: i32, %arg1: i32) -> (i32, i32) {
    %c0_i32 = arith.constant 0 : i32
    %c0_i32_0 = arith.constant 0 : i32
    %c0_i32_1 = arith.constant 0 : i32
    return %c0_i32, %c0_i32_0 : i32, i32
  }
  func.func @transform_5(%arg0: i32, %arg1: i32) -> (i32, i32) {
    %c0_i32 = arith.constant 0 : i32
    %c0_i32_0 = arith.constant 0 : i32
    return %arg0, %c0_i32 : i32, i32
  }
}

</mosaic_0001>

<llo_original>
// kernel: tpu_custom_call.1
$region0: #{tpu_custom_call.1}
  #allocation0 [shape = 'u32[]', space=smem, size = 0x4, offset = 0x4, fixed_abs, tag = 'smem constant byte address 0x4 - core index']
  #allocation1 [shape = 'u32[72,128]{1,0:T(1,128)}', space=vmem, size = 0x9000, scoped, tag = 'internal scratch']
  #allocation2 [shape = 'f32[8,128]{1,0:T(8,128)}', space=vmem, size = 0x1000, scoped, tag = 'scratch operand']
  %s0 = inlined_call_operand.hbm [shape: f32[8,128], index: 0, kind: input, shape index: {}]
  %s1 = inlined_call_operand.hbm [shape: f32[128,128], index: 1, kind: input, shape index: {}]
  %s2 = inlined_call_operand.vmem [shape: f32[1,128], index: 2, kind: input, shape index: {}]
  %s3 = inlined_call_operand.hbm [shape: f32[128,128], index: 3, kind: input, shape index: {}]
  %s4 = inlined_call_operand.vmem [shape: f32[1,128], index: 4, kind: input, shape index: {}]
  %s5 = inlined_call_operand.hbm [shape: f32[8,128], index: 5, kind: output, shape index: {}]
  %s6 = sld [smem:[#allocation0]]
  $region50: #{tpu_custom_call.1} parent=0
    _
  %s8 = ssub.s32 1, %s6
  %s9 = scalar_select 0, %s8, %s6
  $region1: #{tpu_custom_call.1} parent=0
    #allocation3 [shape = 'u8[4096]{0}', space=vmem, size = 0x1000, scoped, tag = 'input window, operand 0, single buffered']
    #allocation4 [shape = 's32[1]{0}', space=sflag, size = 0x4, scoped, tag = 'scoped memory for tpu_custom_call.1']
    #allocation5 [shape = 's32[1]{0}', space=sflag, size = 0x4, scoped, tag = 'scoped memory for tpu_custom_call.1']
    #allocation6 [shape = 'u8[65536]{0}', space=vmem, size = 0x10000, scoped, tag = 'input window, operand 1, single buffered']
    #allocation7 [shape = 's32[1]{0}', space=sflag, size = 0x4, scoped, tag = 'scoped memory for tpu_custom_call.1']
    #allocation8 [shape = 'u8[65536]{0}', space=vmem, size = 0x10000, scoped, tag = 'input window, operand 3, single buffered']
    #allocation9 [shape = 'u8[4096]{0}', space=vmem, size = 0x1000, scoped, tag = 'output window, operand 0, single buffered']
    %10 = vsyncpa [#allocation4], 0
    %11 = vsyncpa [#allocation7], 0
    %12 = vsyncpa [#allocation5], 0
    // Predicated region
    $region2: #{tpu_custom_call.1} parent=1 // pred_check
      _
    $region3: #{tpu_custom_call.1} parent=1 // pred_check_branch
      %14 = sbr.rel (0) target = $region5
    $region4: #{tpu_custom_call.1} parent=1 // pred_region
      %16 = vsyncadd [#allocation4], 0
      %s18 = sshll.u32 %s0, 4
      %s19 = int_to_ptr.hbm [resolvable:$true] %s18
      %s20 = sshll.u32 [#allocation3], 4
      %s21 = int_to_ptr.vmem [resolvable:$true] %s20
      %23 = dma.hbm_to_vmem [thread:$0]  %s19, 128, %s21, [#allocation4]
    $region5: #{tpu_custom_call.1} parent=1 // pred_fallthru
      _
    // Predicated region
    $region6: #{tpu_custom_call.1} parent=1 // pred_check
      _
    $region7: #{tpu_custom_call.1} parent=1 // pred_check_branch
      %25 = sbr.rel (0) target = $region9
    $region8: #{tpu_custom_call.1} parent=1 // pred_region
      %27 = vsyncadd [#allocation7], 0
      %s28 = sshll.u32 %s1, 4
      %s29 = int_to_ptr.hbm [resolvable:$true] %s28
      %s30 = sshll.u32 [#allocation6], 4
      %s31 = int_to_ptr.vmem [resolvable:$true] %s30
      %36 = dma.hbm_to_vmem [thread:$0]  %s29, 2048, %s31, [#allocation7], 128, 128, 8
    $region9: #{tpu_custom_call.1} parent=1 // pred_fallthru
      _
    // Predicated region
    $region10: #{tpu_custom_call.1} parent=1 // pred_check
      _
    $region11: #{tpu_custom_call.1} parent=1 // pred_check_branch
      %38 = sbr.rel (0) target = $region13
    $region12: #{tpu_custom_call.1} parent=1 // pred_region
      _
    $region13: #{tpu_custom_call.1} parent=1 // pred_fallthru
      _
    // Predicated region
    $region14: #{tpu_custom_call.1} parent=1 // pred_check
      _
    $region15: #{tpu_custom_call.1} parent=1 // pred_check_branch
      %40 = sbr.rel (0) target = $region17
    $region16: #{tpu_custom_call.1} parent=1 // pred_region
      %42 = vsyncadd [#allocation7], 0
      %s43 = sshll.u32 %s3, 4
      %s44 = int_to_ptr.hbm [resolvable:$true] %s43
      %s45 = sshll.u32 [#allocation8], 4
      %s46 = int_to_ptr.vmem [resolvable:$true] %s45
      %51 = dma.hbm_to_vmem [thread:$0]  %s44, 2048, %s46, [#allocation7], 128, 128, 8
    $region17: #{tpu_custom_call.1} parent=1 // pred_fallthru
      _
    // Predicated region
    $region18: #{tpu_custom_call.1} parent=1 // pred_check
      _
    $region19: #{tpu_custom_call.1} parent=1 // pred_check_branch
      %53 = sbr.rel (0) target = $region21
    $region20: #{tpu_custom_call.1} parent=1 // pred_region
      _
    $region21: #{tpu_custom_call.1} parent=1 // pred_fallthru
      _
    // Predicated region
    $region22: #{tpu_custom_call.1} parent=1 // pred_check
      _
    $region23: #{tpu_custom_call.1} parent=1 // pred_check_branch
      %55 = sbr.rel (0) target = $region25
    $region24: #{tpu_custom_call.1} parent=1 // pred_region
      %57 = dma.done [#allocation4], 128
    $region25: #{tpu_custom_call.1} parent=1 // pred_fallthru
      _
    // Predicated region
    $region26: #{tpu_custom_call.1} parent=1 // pred_check
      _
    $region27: #{tpu_custom_call.1} parent=1 // pred_check_branch
      %59 = sbr.rel (0) target = $region29
    $region28: #{tpu_custom_call.1} parent=1 // pred_region
      %61 = dma.done [#allocation7], 2048
    $region29: #{tpu_custom_call.1} parent=1 // pred_fallthru
      _
    // Predicated region
    $region30: #{tpu_custom_call.1} parent=1 // pred_check
      _
    $region31: #{tpu_custom_call.1} parent=1 // pred_check_branch
      %63 = sbr.rel (0) target = $region33
    $region32: #{tpu_custom_call.1} parent=1 // pred_region
      %65 = dma.done [#allocation7], 2048
    $region33: #{tpu_custom_call.1} parent=1 // pred_fallthru
      _
    %p66 = scmp.eq.s32.totalorder 0, 0
    // Predicated region
    $region34: #{tpu_custom_call.1} parent=1 // pred_check
      %p67 = pneg %p66
    $region35: #{tpu_custom_call.1} parent=1 // pred_check_branch
      %69 = sbr.rel (%p67) target = $region37
    $region36: #{tpu_custom_call.1} parent=1 // pred_region
      %70 = vst [vmem:[#allocation2] sm:$0xff] 0.0
    $region37: #{tpu_custom_call.1} parent=1 // pred_fallthru
      _
    %v71 = vld [vmem:[#allocation3] sm:$0xff]
    %v72 = vld [vmem:[#allocation6] sm:$0xff]
    %v73 = vld [vmem:[#allocation6 + $0x8] sm:$0xff]
    %v74 = vld [vmem:[#allocation6 + $0x10] sm:$0xff]
    %v75 = vld [vmem:[#allocation6 + $0x18] sm:$0xff]
    %v76 = vld [vmem:[#allocation6 + $0x20] sm:$0xff]
    %v77 = vld [vmem:[#allocation6 + $0x28] sm:$0xff]
    %v78 = vld [vmem:[#allocation6 + $0x30] sm:$0xff]
    %v79 = vld [vmem:[#allocation6 + $0x38] sm:$0xff]
    %v80 = vld [vmem:[#allocation6 + $0x40] sm:$0xff]
    %v81 = vld [vmem:[#allocation6 + $0x48] sm:$0xff]
    %v82 = vld [vmem:[#allocation6 + $0x50] sm:$0xff]
    %v83 = vld [vmem:[#allocation6 + $0x58] sm:$0xff]
    %v84 = vld [vmem:[#allocation6 + $0x60] sm:$0xff]
    %v85 = vld [vmem:[#allocation6 + $0x68] sm:$0xff]
    %v86 = vld [vmem:[#allocation6 + $0x70] sm:$0xff]
    %v87 = vld [vmem:[#allocation6 + $0x78] sm:$0xff]
    %v88 = vld [vmem:[%s2] sm:$0x1]
    %v90 = vperm.slane %v88, 0
    %92 = vmatpush.xpose.msra.mxu0 %v87
    %93 = vmatpush.xpose.msra.mxu0 %v86
    %94 = vmatpush.xpose.msra.mxu0 %v85
    %95 = vmatpush.xpose.msra.mxu0 %v84
    %96 = vmatpush.xpose.msra.mxu0 %v83
    %97 = vmatpush.xpose.msra.mxu0 %v82
    %98 = vmatpush.xpose.msra.mxu0 %v81
    %99 = vmatpush.xpose.msra.mxu0 %v80
    %100 = vmatpush.xpose.msra.mxu0 %v79
    %101 = vmatpush.xpose.msra.mxu0 %v78
    %102 = vmatpush.xpose.msra.mxu0 %v77
    %103 = vmatpush.xpose.msra.mxu0 %v76
    %104 = vmatpush.xpose.msra.mxu0 %v75
    %105 = vmatpush.xpose.msra.mxu0 %v74
    %106 = vmatpush.xpose.msra.mxu0 %v73
    %107 = vmatpush.xpose.msra.mxu0 %v72
    %108 = vmatmul.f32.gmra.mxu0 %v71
    %v109 = vpop.f32.mrf.mxu0
    %v110 = vadd.f32 %v90, %v109
    %111 = vdwg.mxu0
    %v112 = vtanh.pop %v110
    %v113 = vld [vmem:[#allocation2] sm:$0xff]
    %v114 = vld [vmem:[#allocation8] sm:$0xff]
    %v115 = vld [vmem:[#allocation8 + $0x8] sm:$0xff]
    %v116 = vld [vmem:[#allocation8 + $0x10] sm:$0xff]
    %v117 = vld [vmem:[#allocation8 + $0x18] sm:$0xff]
    %v118 = vld [vmem:[#allocation8 + $0x20] sm:$0xff]
    %v119 = vld [vmem:[#allocation8 + $0x28] sm:$0xff]
    %v120 = vld [vmem:[#allocation8 + $0x30] sm:$0xff]
    %v121 = vld [vmem:[#allocation8 + $0x38] sm:$0xff]
    %v122 = vld [vmem:[#allocation8 + $0x40] sm:$0xff]
    %v123 = vld [vmem:[#allocation8 + $0x48] sm:$0xff]
    %v124 = vld [vmem:[#allocation8 + $0x50] sm:$0xff]
    %v125 = vld [vmem:[#allocation8 + $0x58] sm:$0xff]
    %v126 = vld [vmem:[#allocation8 + $0x60] sm:$0xff]
    %v127 = vld [vmem:[#allocation8 + $0x68] sm:$0xff]
    %v128 = vld [vmem:[#allocation8 + $0x70] sm:$0xff]
    %v129 = vld [vmem:[#allocation8 + $0x78] sm:$0xff]
    %130 = vmatpush.xpose.msra.mxu0 %v129
    %131 = vmatpush.xpose.msra.mxu0 %v128
    %132 = vmatpush.xpose.msra.mxu0 %v127
    %133 = vmatpush.xpose.msra.mxu0 %v126
    %134 = vmatpush.xpose.msra.mxu0 %v125
    %135 = vmatpush.xpose.msra.mxu0 %v124
    %136 = vmatpush.xpose.msra.mxu0 %v123
    %137 = vmatpush.xpose.msra.mxu0 %v122
    %138 = vmatpush.xpose.msra.mxu0 %v121
    %139 = vmatpush.xpose.msra.mxu0 %v120
    %140 = vmatpush.xpose.msra.mxu0 %v119
    %141 = vmatpush.xpose.msra.mxu0 %v118
    %142 = vmatpush.xpose.msra.mxu0 %v117
    %143 = vmatpush.xpose.msra.mxu0 %v116
    %144 = vmatpush.xpose.msra.mxu0 %v115
    %145 = vmatpush.xpose.msra.mxu0 %v114
    %146 = vmatmul.f32.gmra.mxu0 %v112
    %v147 = vpop.f32.mrf.mxu0
    %v148 = vadd.f32 0.0, %v147
    %149 = vdwg.mxu0
    %v150 = vadd.f32 %v113, %v148
    %151 = vst [vmem:[#allocation2] sm:$0xff] %v150
    // Predicated region
    $region38: #{tpu_custom_call.1} parent=1 // pred_check
      %p152 = pneg %p66
    $region39: #{tpu_custom_call.1} parent=1 // pred_check_branch
      %154 = sbr.rel (%p152) target = $region41
    $region40: #{tpu_custom_call.1} parent=1 // pred_region
      %v155 = vld [vmem:[#allocation2] sm:$0xff]
      %v156 = vld [vmem:[%s4] sm:$0x1]
      %v158 = vperm.slane %v156, 0
      %v160 = vadd.f32 %v155, %v158
      %161 = vst [vmem:[#allocation9] sm:$0xff] %v160
    $region41: #{tpu_custom_call.1} parent=1 // pred_fallthru
      _
    // Predicated region
    $region42: #{tpu_custom_call.1} parent=1 // pred_check
      _
    $region43: #{tpu_custom_call.1} parent=1 // pred_check_branch
      %163 = sbr.rel (0) target = $region45
    $region44: #{tpu_custom_call.1} parent=1 // pred_region
      %165 = vsyncadd [#allocation5], 0
      %s167 = sshll.u32 [#allocation9], 4
      %s168 = int_to_ptr.vmem [resolvable:$true] %s167
      %s169 = sshll.u32 %s5, 4
      %s170 = int_to_ptr.hbm [resolvable:$true] %s169
      %172 = dma.vmem_to_hbm [thread:$0]  %s168, 128, %s170, [#allocation5]
    $region45: #{tpu_custom_call.1} parent=1 // pred_fallthru
      _
    // Predicated region
    $region46: #{tpu_custom_call.1} parent=1 // pred_check
      _
    $region47: #{tpu_custom_call.1} parent=1 // pred_check_branch
      %174 = sbr.rel (0) target = $region49
    $region48: #{tpu_custom_call.1} parent=1 // pred_region
      %176 = dma.done [#allocation5], 128
    $region49: #{tpu_custom_call.1} parent=1 // pred_fallthru
      _
    %177 = vsyncpa [#allocation4], 1
    %178 = vsyncpa [#allocation7], 1
    %179 = vsyncpa [#allocation5], 1

</llo_original>
